<compile_context>
chip_gen: v6e
topology: v6e:2x2x1
jax: 0.10.0
libtpu: 0.0.40
codegen_flags: <defaults>
</compile_context>

<pallas_src>
import functools
import math

import jax
import jax.numpy as jnp
from jax.experimental import pallas as pl
from jax.experimental.pallas import tpu as pltpu

_EPS = 1e-5


def _ceil_to(x, m):
    return -(-x // m) * m


def _vmem_limit_bytes():
    # ~75% of physical VMEM, capped at 100 MiB (v5e/v6e: 128 MiB, v7x: 64 MiB/TC).
    try:
        cap = int(pltpu.get_tpu_info().vmem_capacity_bytes)
    except Exception:
        cap = 64 * 1024 * 1024          # unknown chip: stay v7x-safe
    return min((cap * 3) // 4, 100 * 1024 * 1024)


_VMEM_LIMIT = _vmem_limit_bytes()


# ----------------------------------------------------------------------------
# Pallas tiled matmul with fused per-channel BN statistics.
#   bf16 operands on the MXU, f32 accumulator, (sum, sum-of-squares) epilogue.
# ----------------------------------------------------------------------------
def _matmul_stats_epilogue(acc, o_ref, sums_ref):
    o_ref[...] = acc.astype(o_ref.dtype)
    s = jnp.sum(acc, axis=0, keepdims=True)
    ss = jnp.sum(acc * acc, axis=0, keepdims=True)
    sums_ref[0] = jnp.concatenate([s, ss], axis=0)


def _matmul_kernel_single(a_ref, b_ref, o_ref, sums_ref):
    d = jnp.dot(a_ref[...], b_ref[...], preferred_element_type=jnp.float32)
    _matmul_stats_epilogue(d, o_ref, sums_ref)


def _matmul_kernel_multi(a_ref, b_ref, o_ref, sums_ref, acc_ref):
    d = jnp.dot(a_ref[...], b_ref[...], preferred_element_type=jnp.float32)
    k = pl.program_id(2)

    @pl.when(k == 0)
    def _():
        acc_ref[...] = d

    @pl.when(k > 0)
    def _():
        acc_ref[...] += d

    @pl.when(k == pl.num_programs(2) - 1)
    def _():
        _matmul_stats_epilogue(acc_ref[...], o_ref, sums_ref)


def _pick_m_tile(m):
    if m <= 1024:
        return max(16, _ceil_to(m, 16))     # single M block, 16-aligned for bf16
    best_t, best_pad = 128, None
    for t in (1024, 512, 256, 128):         # minimize padding, prefer larger tile
        pad = _ceil_to(m, t) - m
        if best_pad is None or pad < best_pad:
            best_t, best_pad = t, pad
    return best_t


def _pick_k_tile(k):
    if k <= 2048:
        return k                            # one K step; full-dim block => no pad
    for t in (1024, 512, 256, 128):
        if k % t == 0:
            return t
    return 512


def _pick_n_tile(n):
    if n <= 256:
        return n                            # full-dim lane block => no N pad
    for t in (256, 128):
        if n % t == 0:
            return t
    return 128


@functools.partial(jax.jit, static_argnames=("out_dtype",))
def matmul_stats_pallas(a, b, out_dtype=jnp.bfloat16):
    """C = A @ B (bf16 MXU, f32 acc).  Also returns per-column (sum, sumsq)."""
    m, k = a.shape
    k2, n = b.shape
    assert k == k2
    a = a.astype(jnp.bfloat16)
    b = b.astype(jnp.bfloat16)

    tm, tk, tn = _pick_m_tile(m), _pick_k_tile(k), _pick_n_tile(n)
    mp, kp, np_ = _ceil_to(m, tm), _ceil_to(k, tk), _ceil_to(n, tn)
    if (mp, kp) != (m, k):                  # pad only when not already multiples
        a = jnp.pad(a, ((0, mp - m), (0, kp - k)))
    if (kp, np_) != (k, n):
        b = jnp.pad(b, ((0, kp - k), (0, np_ - n)))

    gm, gn, gk = mp // tm, np_ // tn, kp // tk
    single = gk == 1
    kernel = _matmul_kernel_single if single else _matmul_kernel_multi
    scratch = [] if single else [pltpu.VMEM((tm, tn), jnp.float32)]
    out_isize = jnp.dtype(out_dtype).itemsize
    cost = pl.CostEstimate(
        flops=2 * mp * np_ * kp,
        transcendentals=0,
        bytes_accessed=mp * kp * 2 + kp * np_ * 2 + mp * np_ * out_isize
        + gm * 2 * np_ * 4)

    out, sums = pl.pallas_call(
        kernel,
        out_shape=(jax.ShapeDtypeStruct((mp, np_), out_dtype),
                   jax.ShapeDtypeStruct((gm, 2, np_), jnp.float32)),
        grid_spec=pltpu.PrefetchScalarGridSpec(
            num_scalar_prefetch=0,
            grid=(gm, gn, gk),
            in_specs=[pl.BlockSpec((tm, tk), lambda i, j, kk: (i, kk)),
                      pl.BlockSpec((tk, tn), lambda i, j, kk: (kk, j))],
            out_specs=[pl.BlockSpec((tm, tn), lambda i, j, kk: (i, j)),
                       pl.BlockSpec((1, 2, tn), lambda i, j, kk: (i, 0, j))],
            scratch_shapes=scratch),
        compiler_params=pltpu.CompilerParams(
            dimension_semantics=("parallel", "parallel", "arbitrary"),
            vmem_limit_bytes=_VMEM_LIMIT),
        cost_estimate=cost,
    )(a, b)
    sums = jnp.sum(sums, axis=0)            # finish the per-i partial reduction
    if (mp, np_) != (m, n):
        out = out[:m, :n]
        sums = sums[:, :n]
    return out, sums


# ----------------------------------------------------------------------------
# Direct 3x3 stride-1 convolution kernel (no im2col): whole padded image block
# resident in VMEM, 9 taps folded into 9 MXU dots into one f32 accumulator,
# fused per-channel (sum, sumsq) statistics output.
# ----------------------------------------------------------------------------
def _conv3x3_s1_kernel(x_ref, w_ref, o_ref, sums_ref, col_ref, acc_ref, *, ho, wo):
    # x_ref: (1, ho+2, wo+2, cin) bf16 ; w_ref: (9, cin, tn) bf16
    # o_ref: (1, ho*wo, tn) bf16 ; sums_ref: (1, 2, tn) f32
    # col_ref: ((ho+2)*wo, cin) bf16 scratch ; acc_ref: (ho*wo, tn) f32 scratch
    first = True
    for dj in range(3):
        for q in range(ho + 2):             # gather the dj-shifted column slab
            col_ref[q * wo:(q + 1) * wo, :] = x_ref[0, q, dj:dj + wo, :]
        for di in range(3):
            t = di * 3 + dj
            a = col_ref[di * wo: di * wo + ho * wo, :]
            d = jnp.dot(a, w_ref[t], preferred_element_type=jnp.float32)
            if first:
                acc_ref[...] = d
                first = False
            else:
                acc_ref[...] += d
    acc = acc_ref[...]
    o_ref[0] = acc.astype(o_ref.dtype)
    s = jnp.sum(acc, axis=0, keepdims=True)
    ss = jnp.sum(acc * acc, axis=0, keepdims=True)
    sums_ref[0] = jnp.concatenate([s, ss], axis=0)


@jax.jit
def _conv3x3_s1_direct(x, w):
    n, h, wd, cin = x.shape
    cout = w.shape[3]
    hp, wp = h + 2, wd + 2
    xp = jnp.pad(x.astype(jnp.bfloat16), ((0, 0), (1, 1), (1, 1), (0, 0)))
    w9 = w.astype(jnp.bfloat16).reshape(9, cin, cout)
    tn = cout if cout <= 256 else 256
    grid = (n, cout // tn)
    cost = pl.CostEstimate(
        flops=2 * n * h * wd * 9 * cin * cout,
        transcendentals=0,
        bytes_accessed=xp.size * 2 + w9.size * 2 + n * h * wd * cout * 2
        + n * 2 * cout * 4)

    out, sums = pl.pallas_call(
        functools.partial(_conv3x3_s1_kernel, ho=h, wo=wd),
        out_shape=(jax.ShapeDtypeStruct((n, h * wd, cout), jnp.bfloat16),
                   jax.ShapeDtypeStruct((n, 2, cout), jnp.float32)),
        grid_spec=pltpu.PrefetchScalarGridSpec(
            num_scalar_prefetch=0,
            grid=grid,
            in_specs=[pl.BlockSpec((1, hp, wp, cin), lambda b, j: (b, 0, 0, 0)),
                      pl.BlockSpec((9, cin, tn), lambda b, j: (0, 0, j))],
            out_specs=[pl.BlockSpec((1, h * wd, tn), lambda b, j: (b, 0, j)),
                       pl.BlockSpec((1, 2, tn), lambda b, j: (b, 0, j))],
            scratch_shapes=[pltpu.VMEM(((h + 2) * wd, cin), jnp.bfloat16),
                            pltpu.VMEM((h * wd, tn), jnp.float32)]),
        compiler_params=pltpu.CompilerParams(
            dimension_semantics=("parallel", "parallel"),
            vmem_limit_bytes=_VMEM_LIMIT),
        cost_estimate=cost,
    )(xp, w9)
    return out.reshape(n, h, wd, cout), jnp.sum(sums, axis=0)


# ----------------------------------------------------------------------------
# Convolution dispatch: 1x1 fast path, direct 3x3/s1 kernel (with per-shape
# fallback), im2col + matmul for the rest.  All paths return (y, (sum, sumsq)).
# ----------------------------------------------------------------------------
@functools.partial(jax.jit, static_argnames=("stride",))
def _conv1x1_stats(x, w, stride):
    n = x.shape[0]
    cin, cout = w.shape[2], w.shape[3]
    xs = x if stride == 1 else x[:, ::stride, ::stride, :]
    ho, wo = xs.shape[1], xs.shape[2]
    out, sums = matmul_stats_pallas(xs.reshape(n * ho * wo, cin),
                                    w.reshape(cin, cout))
    return out.reshape(n, ho, wo, cout), sums


@functools.partial(jax.jit, static_argnames=("stride", "pad"))
def _conv_im2col_stats(x, w, stride, pad):
    n, h, wd, cin = x.shape
    kh, kw, _, cout = w.shape
    ho = (h + 2 * pad - kh) // stride + 1
    wo = (wd + 2 * pad - kw) // stride + 1
    xp = jnp.pad(x, ((0, 0), (pad, pad), (pad, pad), (0, 0)))
    cols = [xp[:, i:i + stride * ho:stride, j:j + stride * wo:stride, :]
            for i in range(kh) for j in range(kw)]
    patches = jnp.stack(cols, axis=3).reshape(n * ho * wo, kh * kw * cin)
    out, sums = matmul_stats_pallas(patches, w.reshape(kh * kw * cin, cout))
    return out.reshape(n, ho, wo, cout), sums


_DIRECT3X3_OK = {}


def conv2d_stats(x, w, *, stride, pad):
    kh, kw = w.shape[0], w.shape[1]
    if kh == 1 and kw == 1 and pad == 0:
        return _conv1x1_stats(x, w, stride=stride)
    if kh == 3 and kw == 3 and stride == 1 and pad == 1:
        key = (tuple(x.shape), tuple(w.shape))
        if _DIRECT3X3_OK.get(key, True):
            try:
                res = _conv3x3_s1_direct(x, w)
                _DIRECT3X3_OK[key] = True
                return res
            except Exception:
                _DIRECT3X3_OK[key] = False  # fall back to im2col for this shape
    return _conv_im2col_stats(x, w, stride=stride, pad=pad)


# ----------------------------------------------------------------------------
# BatchNorm (train-mode batch statistics) apply kernels.
#   Stats come fused from the conv/matmul kernels; here only the cheap
#   per-channel affine finish + the gridded fused apply (+add)(+ReLU) passes.
# ----------------------------------------------------------------------------
@functools.partial(jax.jit, static_argnames=("count",))
def _bn_affine(sums, gamma, beta, count):
    mean = sums[0] / count
    var = jnp.maximum(sums[1] / count - mean * mean, 0.0)
    inv = jax.lax.rsqrt(var + _EPS)
    scale = (gamma * inv).astype(jnp.float32)
    bias = (beta - mean * scale).astype(jnp.float32)
    c = scale.shape[0]
    return scale.reshape(1, c), bias.reshape(1, c)


def _bn_act_kernel(x_ref, s_ref, b_ref, o_ref, *, relu):
    y = x_ref[...].astype(jnp.float32) * s_ref[...] + b_ref[...]
    if relu:
        y = jnp.maximum(y, 0.0)
    o_ref[...] = y.astype(o_ref.dtype)


def _bn_add_relu_kernel(x_ref, r_ref, s_ref, b_ref, o_ref):
    y = x_ref[...].astype(jnp.float32) * s_ref[...] + b_ref[...]
    y = y + r_ref[...].astype(jnp.float32)
    o_ref[...] = jnp.maximum(y, 0.0).astype(o_ref.dtype)


def _bn_ds_add_relu_kernel(x_ref, r_ref, sx_ref, bx_ref, sr_ref, br_ref, o_ref):
    # Downsample branch's BN fused into the residual add (no standalone pass).
    y = x_ref[...].astype(jnp.float32) * sx_ref[...] + bx_ref[...]
    y = y + r_ref[...].astype(jnp.float32) * sr_ref[...] + br_ref[...]
    o_ref[...] = jnp.maximum(y, 0.0).astype(o_ref.dtype)


def _pick_row_tile(r, c):
    # ~4 MiB bf16 per buffer on 128 MiB-VMEM chips, ~2 MiB on v7x.
    target = (4 << 20) if _VMEM_LIMIT >= (80 << 20) else (2 << 20)
    max_rows = max(16, ((target // (2 * max(c, 1))) // 16) * 16)
    for t in (4096, 2048, 1024, 512, 256, 128, 64, 32, 16):
        if t <= max_rows and r % t == 0:
            return t
    return min(max_rows, _ceil_to(r, 16))


def _apply_rows(kernel, row_arrays, vec_arrays):
    r, c = row_arrays[0].shape
    tr = _pick_row_tile(r, c)
    rp = _ceil_to(r, tr)
    if rp != r:                              # zero rows, sliced off afterwards
        row_arrays = [jnp.pad(a, ((0, rp - r), (0, 0))) for a in row_arrays]
    grid = (rp // tr,)
    row_spec = pl.BlockSpec((tr, c), lambda i: (i, 0))
    vec_spec = pl.BlockSpec((1, c), lambda i: (0, 0))
    out = pl.pallas_call(
        kernel,
        out_shape=jax.ShapeDtypeStruct((rp, c), jnp.bfloat16),
        grid_spec=pltpu.PrefetchScalarGridSpec(
            num_scalar_prefetch=0,
            grid=grid,
            in_specs=[row_spec] * len(row_arrays) + [vec_spec] * len(vec_arrays),
            out_specs=row_spec),
        compiler_params=pltpu.CompilerParams(
            dimension_semantics=("parallel",),
            vmem_limit_bytes=_VMEM_LIMIT),
    )(*row_arrays, *vec_arrays)
    return out[:r] if rp != r else out


@functools.partial(jax.jit, static_argnames=("relu",))
def bn_act(x, scale, bias, relu=True):
    n, h, w, c = x.shape
    y = _apply_rows(functools.partial(_bn_act_kernel, relu=relu),
                    [x.reshape(n * h * w, c)], [scale, bias])
    return y.reshape(n, h, w, c)


@jax.jit
def bn_add_relu(x, scale, bias, residual):
    n, h, w, c = x.shape
    y = _apply_rows(_bn_add_relu_kernel,
                    [x.reshape(n * h * w, c), residual.reshape(n * h * w, c)],
                    [scale, bias])
    return y.reshape(n, h, w, c)


@jax.jit
def bn_ds_add_relu(x, scale, bias, residual, r_scale, r_bias):
    n, h, w, c = x.shape
    y = _apply_rows(_bn_ds_add_relu_kernel,
                    [x.reshape(n * h * w, c), residual.reshape(n * h * w, c)],
                    [scale, bias, r_scale, r_bias])
    return y.reshape(n, h, w, c)


def maxpool_3x3_s2(x):
    # TODO(synk): implemented with lax.reduce_window glue, not a Pallas kernel.
    return jax.lax.reduce_window(
        x, jnp.array(-jnp.inf, x.dtype), jax.lax.max,
        window_dimensions=(1, 3, 3, 1),
        window_strides=(1, 2, 2, 1),
        padding=((0, 0), (1, 1), (1, 1), (0, 0)))


# ----------------------------------------------------------------------------
# ResNet-101 definition (Bottleneck blocks, layers = [3, 4, 23, 3])
# ----------------------------------------------------------------------------
def init_params(key, n_channels=1, n_outputs=10):
    counter = [0]

    def nxt():
        counter[0] += 1
        return jax.random.fold_in(key, counter[0])

    def conv_w(kh, kw, cin, cout):
        std = math.sqrt(2.0 / (kh * kw * cin))
        w = std * jax.random.normal(nxt(), (kh, kw, cin, cout), jnp.float32)
        return w.astype(jnp.bfloat16)           # pre-cast once for the MXU

    def bn(c):
        return jnp.ones((c,), jnp.float32), jnp.zeros((c,), jnp.float32)

    params = {"conv1_w": conv_w(7, 7, n_channels, 64)}
    params["bn1_g"], params["bn1_b"] = bn(64)

    layers = []
    inplanes = 64
    cfg = [(64, 3, 1), (128, 4, 2), (256, 23, 2), (512, 3, 2)]
    for planes, nblocks, stride in cfg:
        blocks = []
        for b in range(nblocks):
            s = stride if b == 0 else 1
            p = {"stride": s,
                 "conv1_w": conv_w(1, 1, inplanes, planes)}
            p["bn1_g"], p["bn1_b"] = bn(planes)
            p["conv2_w"] = conv_w(3, 3, planes, planes)
            p["bn2_g"], p["bn2_b"] = bn(planes)
            p["conv3_w"] = conv_w(1, 1, planes, planes * 4)
            p["bn3_g"], p["bn3_b"] = bn(planes * 4)
            if b == 0:  # downsample path (channel and/or spatial mismatch)
                p["ds_w"] = conv_w(1, 1, inplanes, planes * 4)
                p["ds_g"], p["ds_b"] = bn(planes * 4)
            blocks.append(p)
            inplanes = planes * 4
        layers.append(blocks)
    params["layers"] = layers

    params["fc_w"] = (0.01 * jax.random.normal(
        nxt(), (512 * 4, n_outputs), jnp.float32)).astype(jnp.bfloat16)
    params["fc_b"] = jnp.zeros((n_outputs,), jnp.float32)
    return params


def _count(y):
    return int(y.shape[0] * y.shape[1] * y.shape[2])


def bottleneck(x, p):
    out, s1 = conv2d_stats(x, p["conv1_w"], stride=1, pad=0)
    sc, b = _bn_affine(s1, p["bn1_g"], p["bn1_b"], count=_count(out))
    out = bn_act(out, sc, b, relu=True)

    out, s2 = conv2d_stats(out, p["conv2_w"], stride=p["stride"], pad=1)
    sc, b = _bn_affine(s2, p["bn2_g"], p["bn2_b"], count=_count(out))
    out = bn_act(out, sc, b, relu=True)

    out, s3 = conv2d_stats(out, p["conv3_w"], stride=1, pad=0)
    sc3, b3 = _bn_affine(s3, p["bn3_g"], p["bn3_b"], count=_count(out))

    if "ds_w" in p:
        idn, sd = conv2d_stats(x, p["ds_w"], stride=p["stride"], pad=0)
        scd, bd = _bn_affine(sd, p["ds_g"], p["ds_b"], count=_count(idn))
        return bn_ds_add_relu(out, sc3, b3, idn, scd, bd)
    return bn_add_relu(out, sc3, b3, x)


def resnet101_forward(x_nchw, params):
    x = jnp.transpose(x_nchw, (0, 2, 3, 1)).astype(jnp.bfloat16)  # NCHW -> NHWC
    x, s = conv2d_stats(x, params["conv1_w"], stride=2, pad=3)
    sc, b = _bn_affine(s, params["bn1_g"], params["bn1_b"], count=_count(x))
    x = bn_act(x, sc, b, relu=True)
    x = maxpool_3x3_s2(x)
    for blocks in params["layers"]:
        for p in blocks:
            x = bottleneck(x, p)
    # TODO(synk): AdaptiveAvgPool2d((1,1)) done with jnp.mean glue (tiny op).
    feat = jnp.mean(x, axis=(1, 2), dtype=jnp.float32)
    logits, _ = matmul_stats_pallas(feat, params["fc_w"], out_dtype=jnp.float32)
    return logits + params["fc_b"]


if __name__ == "__main__":
    key = jax.random.PRNGKey(0)
    params = init_params(jax.random.fold_in(key, 1), n_channels=1, n_outputs=10)
    x = jax.random.normal(jax.random.fold_in(key, 2), (2, 1, 32, 32), jnp.float32)

    logits = resnet101_forward(x, params)
    logits = jax.block_until_ready(logits)

    assert logits.shape == (2, 10), logits.shape
    assert bool(jnp.all(jnp.isfinite(logits)))
    print("KERNEL_OK")
</pallas_src>

<mosaic_0001>
module attributes {stable_mosaic.version = 11 : i64} {
  func.func @_matmul_kernel_single(%arg0: i32, %arg1: i32, %arg2: i32, %arg3: memref<512x49xbf16, #tpu.memory_space<vmem>>, %arg4: memref<49x64xbf16, #tpu.memory_space<vmem>>, %arg5: memref<512x64xbf16, #tpu.memory_space<vmem>>, %arg6: memref<1x2x64xf32, #tpu.memory_space<vmem>>) attributes {dimension_semantics = [#tpu.dimension_semantics<parallel>, #tpu.dimension_semantics<parallel>, #tpu.dimension_semantics<arbitrary>], iteration_bounds = array<i64: 1, 1, 1>, scalar_prefetch = 0 : i64, scratch_operands = 0 : i64, tpu.core_type = #tpu.core_type<tc>, window_params = [{transform_indices = @transform_0, window_bounds = array<i64: 512, 49>}, {transform_indices = @transform_1, window_bounds = array<i64: 49, 64>}, {transform_indices = @transform_2, window_bounds = array<i64: 512, 64>}, {transform_indices = @transform_3, window_bounds = array<i64: 1, 2, 64>}]} {
    %c0 = arith.constant 0 : index
    %c0_0 = arith.constant 0 : index
    %0 = vector.load %arg3[%c0, %c0_0] : memref<512x49xbf16, #tpu.memory_space<vmem>>, vector<512x49xbf16>
    %c0_1 = arith.constant 0 : index
    %c0_2 = arith.constant 0 : index
    %1 = vector.load %arg4[%c0_1, %c0_2] : memref<49x64xbf16, #tpu.memory_space<vmem>>, vector<49x64xbf16>
    %cst = arith.constant dense<0.000000e+00> : vector<512x64xf32>
    %2 = tpu.matmul %0, %1, %cst {dimension_numbers = #tpu.dot_dimension_numbers<[1], [0], [0], [1], [0, 0, 1, 1], [], []>} : vector<512x49xbf16>, vector<49x64xbf16>, vector<512x64xf32> -> vector<512x64xf32>
    %3 = arith.truncf %2 : vector<512x64xf32> to vector<512x64xbf16>
    %c0_3 = arith.constant 0 : index
    %c0_4 = arith.constant 0 : index
    %4 = vector.load %arg5[%c0_3, %c0_4] : memref<512x64xbf16, #tpu.memory_space<vmem>>, vector<512x64xbf16>
    tpu.vector_store %arg5[%c0_3, %c0_4], %3 {strides = array<i32>} : memref<512x64xbf16, #tpu.memory_space<vmem>>, vector<512x64xbf16>,
    %cst_5 = arith.constant dense<0.000000e+00> : vector<64xf32>
    %5 = vector.multi_reduction <add>, %2, %cst_5 [0] : vector<512x64xf32> to vector<64xf32>
    %6 = vector.shape_cast %5 : vector<64xf32> to vector<1x64xf32>
    %7 = arith.mulf %2, %2 : vector<512x64xf32>
    %cst_6 = arith.constant dense<0.000000e+00> : vector<64xf32>
    %8 = vector.multi_reduction <add>, %7, %cst_6 [0] : vector<512x64xf32> to vector<64xf32>
    %9 = vector.shape_cast %8 : vector<64xf32> to vector<1x64xf32>
    %10 = tpu.concatenate %6, %9 in 0 : vector<1x64xf32>, vector<1x64xf32> -> vector<2x64xf32>
    %c0_7 = arith.constant 0 : index
    %c0_8 = arith.constant 0 : index
    %c0_9 = arith.constant 0 : index
    %11 = vector.load %arg6[%c0_7, %c0_8, %c0_9] : memref<1x2x64xf32, #tpu.memory_space<vmem>>, vector<1x2x64xf32>
    %12 = vector.shape_cast %11 : vector<1x2x64xf32> to vector<2x64xf32>
    %13 = vector.shape_cast %10 : vector<2x64xf32> to vector<1x2x64xf32>
    tpu.vector_store %arg6[%c0_7, %c0_8, %c0_9], %13 {strides = array<i32>} : memref<1x2x64xf32, #tpu.memory_space<vmem>>, vector<1x2x64xf32>,
    return
  }
  func.func @transform_0(%arg0: i32, %arg1: i32, %arg2: i32) -> (i32, i32) {
    %c0_i32 = arith.constant 0 : i32
    return %arg0, %arg2 : i32, i32
  }
  func.func @transform_1(%arg0: i32, %arg1: i32, %arg2: i32) -> (i32, i32) {
    %c0_i32 = arith.constant 0 : i32
    return %arg2, %arg1 : i32, i32
  }
  func.func @transform_2(%arg0: i32, %arg1: i32, %arg2: i32) -> (i32, i32) {
    %c0_i32 = arith.constant 0 : i32
    return %arg0, %arg1 : i32, i32
  }
  func.func @transform_3(%arg0: i32, %arg1: i32, %arg2: i32) -> (i32, i32, i32) {
    %c0_i32 = arith.constant 0 : i32
    %c0_i32_0 = arith.constant 0 : i32
    return %arg0, %c0_i32, %arg1 : i32, i32, i32
  }
}

</mosaic_0001>

<llo_original>
// kernel: matmul_stats_pallas.1
$region0: #{matmul_stats_pallas.1}
  #allocation0 [shape = 'u32[]', space=smem, size = 0x4, offset = 0x4, fixed_abs, tag = 'smem constant byte address 0x4 - core index']
  #allocation1 [shape = 'u32[144,128]{1,0:T(1,128)}', space=vmem, size = 0x12000, scoped, tag = 'internal scratch']
  %s0 = inlined_call_operand.vmem [shape: bf16[512,49], index: 0, kind: input, shape index: {}]
  %s1 = inlined_call_operand.vmem [shape: bf16[49,64], index: 1, kind: input, shape index: {}]
  %s2 = inlined_call_operand.vmem [shape: bf16[512,64], index: 2, kind: output, shape index: {0}]
  %s3 = inlined_call_operand.hbm [shape: f32[1,2,64], index: 3, kind: output, shape index: {1}]
  %4 = xla_tuple %s2, %s3
  %s5 = sld [smem:[#allocation0]]
  $region26: #{matmul_stats_pallas.1} parent=0
    _
  %s7 = ssub.s32 1, %s5
  %s8 = scalar_select 0, %s7, %s5
  $region1: #{matmul_stats_pallas.1} parent=0
    #allocation2 [shape = 'u8[1024]{0}', space=vmem, size = 0x400, scoped, tag = 'output window, operand 1, single buffered']
    #allocation3 [shape = 's32[1]{0}', space=sflag, size = 0x4, scoped, tag = 'scoped memory for matmul_stats_pallas.1']
    %9 = vsyncpa [#allocation3], 0
    // Predicated region
    $region2: #{matmul_stats_pallas.1} parent=1 // pred_check
      _
    $region3: #{matmul_stats_pallas.1} parent=1 // pred_check_branch
      %11 = sbr.rel (0) target = $region5
    $region4: #{matmul_stats_pallas.1} parent=1 // pred_region
      _
    $region5: #{matmul_stats_pallas.1} parent=1 // pred_fallthru
      _
    // Predicated region
    $region6: #{matmul_stats_pallas.1} parent=1 // pred_check
      _
    $region7: #{matmul_stats_pallas.1} parent=1 // pred_check_branch
      %13 = sbr.rel (0) target = $region9
    $region8: #{matmul_stats_pallas.1} parent=1 // pred_region
      _
    $region9: #{matmul_stats_pallas.1} parent=1 // pred_fallthru
      _
    %v15 = vld [vmem:[%s0] sm:$0xf]
    %v16 = vld [vmem:[%s0 + $0x4] sm:$0xf]
    %v17 = vld [vmem:[%s0 + $0x8] sm:$0xf]
    %v18 = vld [vmem:[%s0 + $0xc] sm:$0xf]
    %v19 = vld [vmem:[%s0 + $0x10] sm:$0xf]
    %v20 = vld [vmem:[%s0 + $0x14] sm:$0xf]
    %v21 = vld [vmem:[%s0 + $0x18] sm:$0xf]
    %v22 = vld [vmem:[%s0 + $0x1c] sm:$0xf]
    %v23 = vld [vmem:[%s0 + $0x20] sm:$0xf]
    %v24 = vld [vmem:[%s0 + $0x24] sm:$0xf]
    %v25 = vld [vmem:[%s0 + $0x28] sm:$0xf]
    %v26 = vld [vmem:[%s0 + $0x2c] sm:$0xf]
    %v27 = vld [vmem:[%s0 + $0x30] sm:$0xf]
    %v28 = vld [vmem:[%s0 + $0x34] sm:$0xf]
    %v29 = vld [vmem:[%s0 + $0x38] sm:$0xf]
    %v30 = vld [vmem:[%s0 + $0x3c] sm:$0xf]
    %v31 = vld [vmem:[%s0 + $0x40] sm:$0xf]
    %v32 = vld [vmem:[%s0 + $0x44] sm:$0xf]
    %v33 = vld [vmem:[%s0 + $0x48] sm:$0xf]
    %v34 = vld [vmem:[%s0 + $0x4c] sm:$0xf]
    %v35 = vld [vmem:[%s0 + $0x50] sm:$0xf]
    %v36 = vld [vmem:[%s0 + $0x54] sm:$0xf]
    %v37 = vld [vmem:[%s0 + $0x58] sm:$0xf]
    %v38 = vld [vmem:[%s0 + $0x5c] sm:$0xf]
    %v39 = vld [vmem:[%s0 + $0x60] sm:$0xf]
    %v40 = vld [vmem:[%s0 + $0x64] sm:$0xf]
    %v41 = vld [vmem:[%s0 + $0x68] sm:$0xf]
    %v42 = vld [vmem:[%s0 + $0x6c] sm:$0xf]
    %v43 = vld [vmem:[%s0 + $0x70] sm:$0xf]
    %v44 = vld [vmem:[%s0 + $0x74] sm:$0xf]
    %v45 = vld [vmem:[%s0 + $0x78] sm:$0xf]
    %v46 = vld [vmem:[%s0 + $0x7c] sm:$0xf]
    %v47 = vld [vmem:[%s0 + $0x80] sm:$0xf]
    %v48 = vld [vmem:[%s0 + $0x84] sm:$0xf]
    %v49 = vld [vmem:[%s0 + $0x88] sm:$0xf]
    %v50 = vld [vmem:[%s0 + $0x8c] sm:$0xf]
    %v51 = vld [vmem:[%s0 + $0x90] sm:$0xf]
    %v52 = vld [vmem:[%s0 + $0x94] sm:$0xf]
    %v53 = vld [vmem:[%s0 + $0x98] sm:$0xf]
    %v54 = vld [vmem:[%s0 + $0x9c] sm:$0xf]
    %v55 = vld [vmem:[%s0 + $0xa0] sm:$0xf]
    %v56 = vld [vmem:[%s0 + $0xa4] sm:$0xf]
    %v57 = vld [vmem:[%s0 + $0xa8] sm:$0xf]
    %v58 = vld [vmem:[%s0 + $0xac] sm:$0xf]
    %v59 = vld [vmem:[%s0 + $0xb0] sm:$0xf]
    %v60 = vld [vmem:[%s0 + $0xb4] sm:$0xf]
    %v61 = vld [vmem:[%s0 + $0xb8] sm:$0xf]
    %v62 = vld [vmem:[%s0 + $0xbc] sm:$0xf]
    %v63 = vld [vmem:[%s0 + $0xc0] sm:$0xf]
    %v64 = vld [vmem:[%s0 + $0xc4] sm:$0xf]
    %v65 = vld [vmem:[%s0 + $0xc8] sm:$0xf]
    %v66 = vld [vmem:[%s0 + $0xcc] sm:$0xf]
    %v67 = vld [vmem:[%s0 + $0xd0] sm:$0xf]
    %v68 = vld [vmem:[%s0 + $0xd4] sm:$0xf]
    %v69 = vld [vmem:[%s0 + $0xd8] sm:$0xf]
    %v70 = vld [vmem:[%s0 + $0xdc] sm:$0xf]
    %v71 = vld [vmem:[%s0 + $0xe0] sm:$0xf]
    %v72 = vld [vmem:[%s0 + $0xe4] sm:$0xf]
    %v73 = vld [vmem:[%s0 + $0xe8] sm:$0xf]
    %v74 = vld [vmem:[%s0 + $0xec] sm:$0xf]
    %v75 = vld [vmem:[%s0 + $0xf0] sm:$0xf]
    %v76 = vld [vmem:[%s0 + $0xf4] sm:$0xf]
    %v77 = vld [vmem:[%s0 + $0xf8] sm:$0xf]
    %v78 = vld [vmem:[%s0 + $0xfc] sm:$0xf]
    %v79 = vld [vmem:[%s1] sm:$0xf]
    %v80 = vld [vmem:[%s1 + $0x4] sm:$0xf]
    %v81 = vld [vmem:[%s1 + $0x8] sm:$0xf]
    %v82 = vld [vmem:[%s1 + $0xc] sm:$0xf]
    %v83 = vld [vmem:[%s1 + $0x10] sm:$0xf]
    %v84 = vld [vmem:[%s1 + $0x14] sm:$0xf]
    %v85 = vld [vmem:[%s1 + $0x18] sm:$0x1]
    %v150 = vunpack.c.l.b16 %v15
    %v151 = vunpack.c.l.b16 %v16
    %v152 = vunpack.c.l.b16 %v17
    %v153 = vunpack.c.l.b16 %v18
    %v154 = vunpack.c.l.b16 %v19
    %v155 = vunpack.c.l.b16 %v20
    %v156 = vunpack.c.l.b16 %v21
    %v157 = vunpack.c.l.b16 %v22
    %v158 = vunpack.c.l.b16 %v23
    %v159 = vunpack.c.l.b16 %v24
    %v160 = vunpack.c.l.b16 %v25
    %v161 = vunpack.c.l.b16 %v26
    %v162 = vunpack.c.l.b16 %v27
    %v163 = vunpack.c.l.b16 %v28
    %v164 = vunpack.c.l.b16 %v29
    %v165 = vunpack.c.l.b16 %v30
    %v166 = vunpack.c.l.b16 %v31
    %v167 = vunpack.c.l.b16 %v32
    %v168 = vunpack.c.l.b16 %v33
    %v169 = vunpack.c.l.b16 %v34
    %v170 = vunpack.c.l.b16 %v35
    %v171 = vunpack.c.l.b16 %v36
    %v172 = vunpack.c.l.b16 %v37
    %v173 = vunpack.c.l.b16 %v38
    %v174 = vunpack.c.l.b16 %v39
    %v175 = vunpack.c.l.b16 %v40
    %v176 = vunpack.c.l.b16 %v41
    %v177 = vunpack.c.l.b16 %v42
    %v178 = vunpack.c.l.b16 %v43
    %v179 = vunpack.c.l.b16 %v44
    %v180 = vunpack.c.l.b16 %v45
    %v181 = vunpack.c.l.b16 %v46
    %v182 = vunpack.c.l.b16 %v47
    %v183 = vunpack.c.l.b16 %v48
    %v184 = vunpack.c.l.b16 %v49
    %v185 = vunpack.c.l.b16 %v50
    %v186 = vunpack.c.l.b16 %v51
    %v187 = vunpack.c.l.b16 %v52
    %v188 = vunpack.c.l.b16 %v53
    %v189 = vunpack.c.l.b16 %v54
    %v190 = vunpack.c.l.b16 %v55
    %v191 = vunpack.c.l.b16 %v56
    %v192 = vunpack.c.l.b16 %v57
    %v193 = vunpack.c.l.b16 %v58
    %v194 = vunpack.c.l.b16 %v59
    %v195 = vunpack.c.l.b16 %v60
    %v196 = vunpack.c.l.b16 %v61
    %v197 = vunpack.c.l.b16 %v62
    %v198 = vunpack.c.l.b16 %v63
    %v199 = vunpack.c.l.b16 %v64
    %v200 = vunpack.c.l.b16 %v65
    %v201 = vunpack.c.l.b16 %v66
    %v202 = vunpack.c.l.b16 %v67
    %v203 = vunpack.c.l.b16 %v68
    %v204 = vunpack.c.l.b16 %v69
    %v205 = vunpack.c.l.b16 %v70
    %v206 = vunpack.c.l.b16 %v71
    %v207 = vunpack.c.l.b16 %v72
    %v208 = vunpack.c.l.b16 %v73
    %v209 = vunpack.c.l.b16 %v74
    %v210 = vunpack.c.l.b16 %v75
    %v211 = vunpack.c.l.b16 %v76
    %v212 = vunpack.c.l.b16 %v77
    %v213 = vunpack.c.l.b16 %v78
    %v214 = vpack.c.b16 %v151, %v150
    %v215 = vpack.c.b16 %v153, %v152
    %v216 = vpack.c.b16 %v155, %v154
    %v217 = vpack.c.b16 %v157, %v156
    %v218 = vpack.c.b16 %v159, %v158
    %v219 = vpack.c.b16 %v161, %v160
    %v220 = vpack.c.b16 %v163, %v162
    %v221 = vpack.c.b16 %v165, %v164
    %v222 = vpack.c.b16 %v167, %v166
    %v223 = vpack.c.b16 %v169, %v168
    %v224 = vpack.c.b16 %v171, %v170
    %v225 = vpack.c.b16 %v173, %v172
    %v226 = vpack.c.b16 %v175, %v174
    %v227 = vpack.c.b16 %v177, %v176
    %v228 = vpack.c.b16 %v179, %v178
    %v229 = vpack.c.b16 %v181, %v180
    %v230 = vpack.c.b16 %v183, %v182
    %v231 = vpack.c.b16 %v185, %v184
    %v232 = vpack.c.b16 %v187, %v186
    %v233 = vpack.c.b16 %v189, %v188
    %v234 = vpack.c.b16 %v191, %v190
    %v235 = vpack.c.b16 %v193, %v192
    %v236 = vpack.c.b16 %v195, %v194
    %v237 = vpack.c.b16 %v197, %v196
    %v238 = vpack.c.b16 %v199, %v198
    %v239 = vpack.c.b16 %v201, %v200
    %v240 = vpack.c.b16 %v203, %v202
    %v241 = vpack.c.b16 %v205, %v204
    %v242 = vpack.c.b16 %v207, %v206
    %v243 = vpack.c.b16 %v209, %v208
    %v244 = vpack.c.b16 %v211, %v210
    %v245 = vpack.c.b16 %v213, %v212
    %v253 = vunpack.c.l.b16 %v79
    %v254 = vunpack.c.l.b16 %v80
    %v255 = vunpack.c.l.b16 %v81
    %v256 = vunpack.c.l.b16 %v82
    %v257 = vunpack.c.l.b16 %v83
    %v258 = vunpack.c.l.b16 %v84
    %v259 = vunpack.c.l.b16 %v85
    %v260 = vpack.c.b16 %v254, %v253
    %v261 = vpack.c.b16 %v256, %v255
    %v262 = vpack.c.b16 %v258, %v257
    %v263 = vpack.c.b16 %v259, %v259
    %vm267 = vcmask 400384
    %v269 = vsel %vm267, %v214, 0
    %v272 = vsel %vm267, %v215, 0
    %v275 = vsel %vm267, %v216, 0
    %v278 = vsel %vm267, %v217, 0
    %v281 = vsel %vm267, %v218, 0
    %v284 = vsel %vm267, %v219, 0
    %v287 = vsel %vm267, %v220, 0
    %v290 = vsel %vm267, %v221, 0
    %v293 = vsel %vm267, %v222, 0
    %v296 = vsel %vm267, %v223, 0
    %v299 = vsel %vm267, %v224, 0
    %v302 = vsel %vm267, %v225, 0
    %v305 = vsel %vm267, %v226, 0
    %v308 = vsel %vm267, %v227, 0
    %v311 = vsel %vm267, %v228, 0
    %v314 = vsel %vm267, %v229, 0
    %v317 = vsel %vm267, %v230, 0
    %v320 = vsel %vm267, %v231, 0
    %v323 = vsel %vm267, %v232, 0
    %v326 = vsel %vm267, %v233, 0
    %v329 = vsel %vm267, %v234, 0
    %v332 = vsel %vm267, %v235, 0
    %v335 = vsel %vm267, %v236, 0
    %v338 = vsel %vm267, %v237, 0
    %v341 = vsel %vm267, %v238, 0
    %v344 = vsel %vm267, %v239, 0
    %v347 = vsel %vm267, %v240, 0
    %v350 = vsel %vm267, %v241, 0
    %v353 = vsel %vm267, %v242, 0
    %v356 = vsel %vm267, %v243, 0
    %v359 = vsel %vm267, %v244, 0
    %v362 = vsel %vm267, %v245, 0
    %vm364 = vcmask 1040384
    %v365 = vsel 0, 4294967295, 65535
    %v366 = vsel %vm364, %v365, 0
    %v368 = vand.u32 %v263, %v366
    %370 = vmatprep.subr.bf16.mxu0 0
    %371 = vmatpush1.bf16.msra.mxu0 0
    %372 = vmatprep.subr.bf16.mxu0 0
    %373 = vmatpush1.bf16.msra.mxu0 0
    %374 = vmatprep.subr.bf16.mxu0 0
    %375 = vmatpush1.bf16.msra.mxu0 0
    %376 = vmatprep.subr.bf16.mxu0 0
    %377 = vmatpush1.bf16.msra.mxu0 0
    %378 = vmatprep.subr.bf16.mxu0 0
    %379 = vmatpush1.bf16.msra.mxu0 %v368
    %380 = vmatprep.subr.bf16.mxu0 0
    %381 = vmatpush1.bf16.msra.mxu0 %v262
    %382 = vmatprep.subr.bf16.mxu0 0
    %383 = vmatpush1.bf16.msra.mxu0 %v261
    %384 = vmatprep.subr.bf16.mxu0 0
    %385 = vmatpush1.bf16.msra.mxu0 %v260
    %386 = vmatprep.subr.bf16.mxu0 0
    %387 = vmatpush2.bf16.msra.mxu0 0
    %388 = vmatprep.subr.bf16.mxu0 0
    %389 = vmatpush2.bf16.msra.mxu0 0
    %390 = vmatprep.subr.bf16.mxu0 0
    %391 = vmatpush2.bf16.msra.mxu0 0
    %392 = vmatprep.subr.bf16.mxu0 0
    %393 = vmatpush2.bf16.msra.mxu0 0
    %394 = vmatprep.subr.bf16.mxu0 0
    %395 = vmatpush2.bf16.msra.mxu0 0
    %396 = vmatprep.subr.bf16.mxu0 0
    %397 = vmatpush2.bf16.msra.mxu0 0
    %398 = vmatprep.subr.bf16.mxu0 0
    %399 = vmatpush2.bf16.msra.mxu0 0
    %400 = vmatprep.subr.bf16.mxu0 0
    %401 = vmatpush2.bf16.msra.mxu0 0
    %402 = vmatprep.mubr.bf16.mxu0 0
    %403 = vmatmul.mubr.bf16.gmra.mxu0 %v269
    %v404 = vpop.f32.mrf.mxu0
    %v405 = vadd.f32 0.0, %v404
    %v406 = vpop.f32.mrf.mxu0
    %v407 = vpop.f32.mrf.mxu0
    %v408 = vadd.f32 0.0, %v407
    %v409 = vpop.f32.mrf.mxu0
    %410 = vmatprep.mubr.bf16.mxu0 0
    %411 = vmatmul.mubr.bf16.gmra.mxu0 %v272
    %v412 = vpop.f32.mrf.mxu0
    %v413 = vadd.f32 0.0, %v412
    %v414 = vpop.f32.mrf.mxu0
    %v415 = vpop.f32.mrf.mxu0
    %v416 = vadd.f32 0.0, %v415
    %v417 = vpop.f32.mrf.mxu0
    %418 = vmatprep.mubr.bf16.mxu0 0
    %419 = vmatmul.mubr.bf16.gmra.mxu0 %v275
    %v420 = vpop.f32.mrf.mxu0
    %v421 = vadd.f32 0.0, %v420
    %v422 = vpop.f32.mrf.mxu0
    %v423 = vpop.f32.mrf.mxu0
    %v424 = vadd.f32 0.0, %v423
    %v425 = vpop.f32.mrf.mxu0
    %426 = vmatprep.mubr.bf16.mxu0 0
    %427 = vmatmul.mubr.bf16.gmra.mxu0 %v278
    %v428 = vpop.f32.mrf.mxu0
    %v429 = vadd.f32 0.0, %v428
    %v430 = vpop.f32.mrf.mxu0
    %v431 = vpop.f32.mrf.mxu0
    %v432 = vadd.f32 0.0, %v431
    %v433 = vpop.f32.mrf.mxu0
    %434 = vmatprep.mubr.bf16.mxu0 0
    %435 = vmatmul.mubr.bf16.gmra.mxu0 %v281
    %v436 = vpop.f32.mrf.mxu0
    %v437 = vadd.f32 0.0, %v436
    %v438 = vpop.f32.mrf.mxu0
    %v439 = vpop.f32.mrf.mxu0
    %v440 = vadd.f32 0.0, %v439
    %v441 = vpop.f32.mrf.mxu0
    %442 = vmatprep.mubr.bf16.mxu0 0
    %443 = vmatmul.mubr.bf16.gmra.mxu0 %v284
    %v444 = vpop.f32.mrf.mxu0
    %v445 = vadd.f32 0.0, %v444
    %v446 = vpop.f32.mrf.mxu0
    %v447 = vpop.f32.mrf.mxu0
    %v448 = vadd.f32 0.0, %v447
    %v449 = vpop.f32.mrf.mxu0
    %450 = vmatprep.mubr.bf16.mxu0 0
    %451 = vmatmul.mubr.bf16.gmra.mxu0 %v287
    %v452 = vpop.f32.mrf.mxu0
    %v453 = vadd.f32 0.0, %v452
    %v454 = vpop.f32.mrf.mxu0
    %v455 = vpop.f32.mrf.mxu0
    %v456 = vadd.f32 0.0, %v455
    %v457 = vpop.f32.mrf.mxu0
    %458 = vmatprep.mubr.bf16.mxu0 0
    %459 = vmatmul.mubr.bf16.gmra.mxu0 %v290
    %v460 = vpop.f32.mrf.mxu0
    %v461 = vadd.f32 0.0, %v460
    %v462 = vpop.f32.mrf.mxu0
    %v463 = vpop.f32.mrf.mxu0
    %v464 = vadd.f32 0.0, %v463
    %v465 = vpop.f32.mrf.mxu0
    %466 = vmatprep.mubr.bf16.mxu0 0
    %467 = vmatmul.mubr.bf16.gmra.mxu0 %v293
    %v468 = vpop.f32.mrf.mxu0
    %v469 = vadd.f32 0.0, %v468
    %v470 = vpop.f32.mrf.mxu0
    %v471 = vpop.f32.mrf.mxu0
    %v472 = vadd.f32 0.0, %v471
    %v473 = vpop.f32.mrf.mxu0
    %474 = vmatprep.mubr.bf16.mxu0 0
    %475 = vmatmul.mubr.bf16.gmra.mxu0 %v296
    %v476 = vpop.f32.mrf.mxu0
    %v477 = vadd.f32 0.0, %v476
    %v478 = vpop.f32.mrf.mxu0
    %v479 = vpop.f32.mrf.mxu0
    %v480 = vadd.f32 0.0, %v479
    %v481 = vpop.f32.mrf.mxu0
    %482 = vmatprep.mubr.bf16.mxu0 0
    %483 = vmatmul.mubr.bf16.gmra.mxu0 %v299
    %v484 = vpop.f32.mrf.mxu0
    %v485 = vadd.f32 0.0, %v484
    %v486 = vpop.f32.mrf.mxu0
    %v487 = vpop.f32.mrf.mxu0
    %v488 = vadd.f32 0.0, %v487
    %v489 = vpop.f32.mrf.mxu0
    %490 = vmatprep.mubr.bf16.mxu0 0
    %491 = vmatmul.mubr.bf16.gmra.mxu0 %v302
    %v492 = vpop.f32.mrf.mxu0
    %v493 = vadd.f32 0.0, %v492
    %v494 = vpop.f32.mrf.mxu0
    %v495 = vpop.f32.mrf.mxu0
    %v496 = vadd.f32 0.0, %v495
    %v497 = vpop.f32.mrf.mxu0
    %498 = vmatprep.mubr.bf16.mxu0 0
    %499 = vmatmul.mubr.bf16.gmra.mxu0 %v305
    %v500 = vpop.f32.mrf.mxu0
    %v501 = vadd.f32 0.0, %v500
    %v502 = vpop.f32.mrf.mxu0
    %v503 = vpop.f32.mrf.mxu0
    %v504 = vadd.f32 0.0, %v503
    %v505 = vpop.f32.mrf.mxu0
    %506 = vmatprep.mubr.bf16.mxu0 0
    %507 = vmatmul.mubr.bf16.gmra.mxu0 %v308
    %v508 = vpop.f32.mrf.mxu0
    %v509 = vadd.f32 0.0, %v508
    %v510 = vpop.f32.mrf.mxu0
    %v511 = vpop.f32.mrf.mxu0
    %v512 = vadd.f32 0.0, %v511
    %v513 = vpop.f32.mrf.mxu0
    %514 = vmatprep.mubr.bf16.mxu0 0
    %515 = vmatmul.mubr.bf16.gmra.mxu0 %v311
    %v516 = vpop.f32.mrf.mxu0
    %v517 = vadd.f32 0.0, %v516
    %v518 = vpop.f32.mrf.mxu0
    %v519 = vpop.f32.mrf.mxu0
    %v520 = vadd.f32 0.0, %v519
    %v521 = vpop.f32.mrf.mxu0
    %522 = vmatprep.mubr.bf16.mxu0 0
    %523 = vmatmul.mubr.bf16.gmra.mxu0 %v314
    %v524 = vpop.f32.mrf.mxu0
    %v525 = vadd.f32 0.0, %v524
    %v526 = vpop.f32.mrf.mxu0
    %v527 = vpop.f32.mrf.mxu0
    %v528 = vadd.f32 0.0, %v527
    %v529 = vpop.f32.mrf.mxu0
    %530 = vmatprep.mubr.bf16.mxu0 0
    %531 = vmatmul.mubr.bf16.gmra.mxu0 %v317
    %v532 = vpop.f32.mrf.mxu0
    %v533 = vadd.f32 0.0, %v532
    %v534 = vpop.f32.mrf.mxu0
    %v535 = vpop.f32.mrf.mxu0
    %v536 = vadd.f32 0.0, %v535
    %v537 = vpop.f32.mrf.mxu0
    %538 = vmatprep.mubr.bf16.mxu0 0
    %539 = vmatmul.mubr.bf16.gmra.mxu0 %v320
    %v540 = vpop.f32.mrf.mxu0
    %v541 = vadd.f32 0.0, %v540
    %v542 = vpop.f32.mrf.mxu0
    %v543 = vpop.f32.mrf.mxu0
    %v544 = vadd.f32 0.0, %v543
    %v545 = vpop.f32.mrf.mxu0
    %546 = vmatprep.mubr.bf16.mxu0 0
    %547 = vmatmul.mubr.bf16.gmra.mxu0 %v323
    %v548 = vpop.f32.mrf.mxu0
    %v549 = vadd.f32 0.0, %v548
    %v550 = vpop.f32.mrf.mxu0
    %v551 = vpop.f32.mrf.mxu0
    %v552 = vadd.f32 0.0, %v551
    %v553 = vpop.f32.mrf.mxu0
    %554 = vmatprep.mubr.bf16.mxu0 0
    %555 = vmatmul.mubr.bf16.gmra.mxu0 %v326
    %v556 = vpop.f32.mrf.mxu0
    %v557 = vadd.f32 0.0, %v556
    %v558 = vpop.f32.mrf.mxu0
    %v559 = vpop.f32.mrf.mxu0
    %v560 = vadd.f32 0.0, %v559
    %v561 = vpop.f32.mrf.mxu0
    %562 = vmatprep.mubr.bf16.mxu0 0
    %563 = vmatmul.mubr.bf16.gmra.mxu0 %v329
    %v564 = vpop.f32.mrf.mxu0
    %v565 = vadd.f32 0.0, %v564
    %v566 = vpop.f32.mrf.mxu0
    %v567 = vpop.f32.mrf.mxu0
    %v568 = vadd.f32 0.0, %v567
    %v569 = vpop.f32.mrf.mxu0
    %570 = vmatprep.mubr.bf16.mxu0 0
    %571 = vmatmul.mubr.bf16.gmra.mxu0 %v332
    %v572 = vpop.f32.mrf.mxu0
    %v573 = vadd.f32 0.0, %v572
    %v574 = vpop.f32.mrf.mxu0
    %v575 = vpop.f32.mrf.mxu0
    %v576 = vadd.f32 0.0, %v575
    %v577 = vpop.f32.mrf.mxu0
    %578 = vmatprep.mubr.bf16.mxu0 0
    %579 = vmatmul.mubr.bf16.gmra.mxu0 %v335
    %v580 = vpop.f32.mrf.mxu0
    %v581 = vadd.f32 0.0, %v580
    %v582 = vpop.f32.mrf.mxu0
    %v583 = vpop.f32.mrf.mxu0
    %v584 = vadd.f32 0.0, %v583
    %v585 = vpop.f32.mrf.mxu0
    %586 = vmatprep.mubr.bf16.mxu0 0
    %587 = vmatmul.mubr.bf16.gmra.mxu0 %v338
    %v588 = vpop.f32.mrf.mxu0
    %v589 = vadd.f32 0.0, %v588
    %v590 = vpop.f32.mrf.mxu0
    %v591 = vpop.f32.mrf.mxu0
    %v592 = vadd.f32 0.0, %v591
    %v593 = vpop.f32.mrf.mxu0
    %594 = vmatprep.mubr.bf16.mxu0 0
    %595 = vmatmul.mubr.bf16.gmra.mxu0 %v341
    %v596 = vpop.f32.mrf.mxu0
    %v597 = vadd.f32 0.0, %v596
    %v598 = vpop.f32.mrf.mxu0
    %v599 = vpop.f32.mrf.mxu0
    %v600 = vadd.f32 0.0, %v599
    %v601 = vpop.f32.mrf.mxu0
    %602 = vmatprep.mubr.bf16.mxu0 0
    %603 = vmatmul.mubr.bf16.gmra.mxu0 %v344
    %v604 = vpop.f32.mrf.mxu0
    %v605 = vadd.f32 0.0, %v604
    %v606 = vpop.f32.mrf.mxu0
    %v607 = vpop.f32.mrf.mxu0
    %v608 = vadd.f32 0.0, %v607
    %v609 = vpop.f32.mrf.mxu0
    %610 = vmatprep.mubr.bf16.mxu0 0
    %611 = vmatmul.mubr.bf16.gmra.mxu0 %v347
    %v612 = vpop.f32.mrf.mxu0
    %v613 = vadd.f32 0.0, %v612
    %v614 = vpop.f32.mrf.mxu0
    %v615 = vpop.f32.mrf.mxu0
    %v616 = vadd.f32 0.0, %v615
    %v617 = vpop.f32.mrf.mxu0
    %618 = vmatprep.mubr.bf16.mxu0 0
    %619 = vmatmul.mubr.bf16.gmra.mxu0 %v350
    %v620 = vpop.f32.mrf.mxu0
    %v621 = vadd.f32 0.0, %v620
    %v622 = vpop.f32.mrf.mxu0
    %v623 = vpop.f32.mrf.mxu0
    %v624 = vadd.f32 0.0, %v623
    %v625 = vpop.f32.mrf.mxu0
    %626 = vmatprep.mubr.bf16.mxu0 0
    %627 = vmatmul.mubr.bf16.gmra.mxu0 %v353
    %v628 = vpop.f32.mrf.mxu0
    %v629 = vadd.f32 0.0, %v628
    %v630 = vpop.f32.mrf.mxu0
    %v631 = vpop.f32.mrf.mxu0
    %v632 = vadd.f32 0.0, %v631
    %v633 = vpop.f32.mrf.mxu0
    %634 = vmatprep.mubr.bf16.mxu0 0
    %635 = vmatmul.mubr.bf16.gmra.mxu0 %v356
    %v636 = vpop.f32.mrf.mxu0
    %v637 = vadd.f32 0.0, %v636
    %v638 = vpop.f32.mrf.mxu0
    %v639 = vpop.f32.mrf.mxu0
    %v640 = vadd.f32 0.0, %v639
    %v641 = vpop.f32.mrf.mxu0
    %642 = vmatprep.mubr.bf16.mxu0 0
    %643 = vmatmul.mubr.bf16.gmra.mxu0 %v359
    %v644 = vpop.f32.mrf.mxu0
    %v645 = vadd.f32 0.0, %v644
    %v646 = vpop.f32.mrf.mxu0
    %v647 = vpop.f32.mrf.mxu0
    %v648 = vadd.f32 0.0, %v647
    %v649 = vpop.f32.mrf.mxu0
    %650 = vmatprep.mubr.bf16.mxu0 0
    %651 = vmatmul.mubr.bf16.gmra.mxu0 %v362
    %v652 = vpop.f32.mrf.mxu0
    %v653 = vadd.f32 0.0, %v652
    %v654 = vpop.f32.mrf.mxu0
    %v655 = vpop.f32.mrf.mxu0
    %v656 = vadd.f32 0.0, %v655
    %v657 = vpop.f32.mrf.mxu0
    %658 = vdwg.mxu0
    %v659 = vpack.c.bf16 %v408, %v405
    %v660 = vpack.c.bf16 %v416, %v413
    %v661 = vpack.c.bf16 %v424, %v421
    %v662 = vpack.c.bf16 %v432, %v429
    %v663 = vpack.c.bf16 %v440, %v437
    %v664 = vpack.c.bf16 %v448, %v445
    %v665 = vpack.c.bf16 %v456, %v453
    %v666 = vpack.c.bf16 %v464, %v461
    %v667 = vpack.c.bf16 %v472, %v469
    %v668 = vpack.c.bf16 %v480, %v477
    %v669 = vpack.c.bf16 %v488, %v485
    %v670 = vpack.c.bf16 %v496, %v493
    %v671 = vpack.c.bf16 %v504, %v501
    %v672 = vpack.c.bf16 %v512, %v509
    %v673 = vpack.c.bf16 %v520, %v517
    %v674 = vpack.c.bf16 %v528, %v525
    %v675 = vpack.c.bf16 %v536, %v533
    %v676 = vpack.c.bf16 %v544, %v541
    %v677 = vpack.c.bf16 %v552, %v549
    %v678 = vpack.c.bf16 %v560, %v557
    %v679 = vpack.c.bf16 %v568, %v565
    %v680 = vpack.c.bf16 %v576, %v573
    %v681 = vpack.c.bf16 %v584, %v581
    %v682 = vpack.c.bf16 %v592, %v589
    %v683 = vpack.c.bf16 %v600, %v597
    %v684 = vpack.c.bf16 %v608, %v605
    %v685 = vpack.c.bf16 %v616, %v613
    %v686 = vpack.c.bf16 %v624, %v621
    %v687 = vpack.c.bf16 %v632, %v629
    %v688 = vpack.c.bf16 %v640, %v637
    %v689 = vpack.c.bf16 %v648, %v645
    %v690 = vpack.c.bf16 %v656, %v653
    %v723 = vunpack.c.l.b16 %v659
    %v724 = vunpack.c.h.b16 %v659
    %v725 = vunpack.c.l.b16 %v660
    %v726 = vunpack.c.h.b16 %v660
    %v727 = vunpack.c.l.b16 %v661
    %v728 = vunpack.c.h.b16 %v661
    %v729 = vunpack.c.l.b16 %v662
    %v730 = vunpack.c.h.b16 %v662
    %v731 = vunpack.c.l.b16 %v663
    %v732 = vunpack.c.h.b16 %v663
    %v733 = vunpack.c.l.b16 %v664
    %v734 = vunpack.c.h.b16 %v664
    %v735 = vunpack.c.l.b16 %v665
    %v736 = vunpack.c.h.b16 %v665
    %v737 = vunpack.c.l.b16 %v666
    %v738 = vunpack.c.h.b16 %v666
    %v739 = vunpack.c.l.b16 %v667
    %v740 = vunpack.c.h.b16 %v667
    %v741 = vunpack.c.l.b16 %v668
    %v742 = vunpack.c.h.b16 %v668
    %v743 = vunpack.c.l.b16 %v669
    %v744 = vunpack.c.h.b16 %v669
    %v745 = vunpack.c.l.b16 %v670
    %v746 = vunpack.c.h.b16 %v670
    %v747 = vunpack.c.l.b16 %v671
    %v748 = vunpack.c.h.b16 %v671
    %v749 = vunpack.c.l.b16 %v672
    %v750 = vunpack.c.h.b16 %v672
    %v751 = vunpack.c.l.b16 %v673
    %v752 = vunpack.c.h.b16 %v673
    %v753 = vunpack.c.l.b16 %v674
    %v754 = vunpack.c.h.b16 %v674
    %v755 = vunpack.c.l.b16 %v675
    %v756 = vunpack.c.h.b16 %v675
    %v757 = vunpack.c.l.b16 %v676
    %v758 = vunpack.c.h.b16 %v676
    %v759 = vunpack.c.l.b16 %v677
    %v760 = vunpack.c.h.b16 %v677
    %v761 = vunpack.c.l.b16 %v678
    %v762 = vunpack.c.h.b16 %v678
    %v763 = vunpack.c.l.b16 %v679
    %v764 = vunpack.c.h.b16 %v679
    %v765 = vunpack.c.l.b16 %v680
    %v766 = vunpack.c.h.b16 %v680
    %v767 = vunpack.c.l.b16 %v681
    %v768 = vunpack.c.h.b16 %v681
    %v769 = vunpack.c.l.b16 %v682
    %v770 = vunpack.c.h.b16 %v682
    %v771 = vunpack.c.l.b16 %v683
    %v772 = vunpack.c.h.b16 %v683
    %v773 = vunpack.c.l.b16 %v684
    %v774 = vunpack.c.h.b16 %v684
    %v775 = vunpack.c.l.b16 %v685
    %v776 = vunpack.c.h.b16 %v685
    %v777 = vunpack.c.l.b16 %v686
    %v778 = vunpack.c.h.b16 %v686
    %v779 = vunpack.c.l.b16 %v687
    %v780 = vunpack.c.h.b16 %v687
    %v781 = vunpack.c.l.b16 %v688
    %v782 = vunpack.c.h.b16 %v688
    %v783 = vunpack.c.l.b16 %v689
    %v784 = vunpack.c.h.b16 %v689
    %v785 = vunpack.c.l.b16 %v690
    %v786 = vunpack.c.h.b16 %v690
    %v787 = vpack.c.b16 %v723, %v723
    %v788 = vpack.c.b16 %v724, %v724
    %v789 = vpack.c.b16 %v725, %v725
    %v790 = vpack.c.b16 %v726, %v726
    %v791 = vpack.c.b16 %v727, %v727
    %v792 = vpack.c.b16 %v728, %v728
    %v793 = vpack.c.b16 %v729, %v729
    %v794 = vpack.c.b16 %v730, %v730
    %v795 = vpack.c.b16 %v731, %v731
    %v796 = vpack.c.b16 %v732, %v732
    %v797 = vpack.c.b16 %v733, %v733
    %v798 = vpack.c.b16 %v734, %v734
    %v799 = vpack.c.b16 %v735, %v735
    %v800 = vpack.c.b16 %v736, %v736
    %v801 = vpack.c.b16 %v737, %v737
    %v802 = vpack.c.b16 %v738, %v738
    %v803 = vpack.c.b16 %v739, %v739
    %v804 = vpack.c.b16 %v740, %v740
    %v805 = vpack.c.b16 %v741, %v741
    %v806 = vpack.c.b16 %v742, %v742
    %v807 = vpack.c.b16 %v743, %v743
    %v808 = vpack.c.b16 %v744, %v744
    %v809 = vpack.c.b16 %v745, %v745
    %v810 = vpack.c.b16 %v746, %v746
    %v811 = vpack.c.b16 %v747, %v747
    %v812 = vpack.c.b16 %v748, %v748
    %v813 = vpack.c.b16 %v749, %v749
    %v814 = vpack.c.b16 %v750, %v750
    %v815 = vpack.c.b16 %v751, %v751
    %v816 = vpack.c.b16 %v752, %v752
    %v817 = vpack.c.b16 %v753, %v753
    %v818 = vpack.c.b16 %v754, %v754
    %v819 = vpack.c.b16 %v755, %v755
    %v820 = vpack.c.b16 %v756, %v756
    %v821 = vpack.c.b16 %v757, %v757
    %v822 = vpack.c.b16 %v758, %v758
    %v823 = vpack.c.b16 %v759, %v759
    %v824 = vpack.c.b16 %v760, %v760
    %v825 = vpack.c.b16 %v761, %v761
    %v826 = vpack.c.b16 %v762, %v762
    %v827 = vpack.c.b16 %v763, %v763
    %v828 = vpack.c.b16 %v764, %v764
    %v829 = vpack.c.b16 %v765, %v765
    %v830 = vpack.c.b16 %v766, %v766
    %v831 = vpack.c.b16 %v767, %v767
    %v832 = vpack.c.b16 %v768, %v768
    %v833 = vpack.c.b16 %v769, %v769
    %v834 = vpack.c.b16 %v770, %v770
    %v835 = vpack.c.b16 %v771, %v771
    %v836 = vpack.c.b16 %v772, %v772
    %v837 = vpack.c.b16 %v773, %v773
    %v838 = vpack.c.b16 %v774, %v774
    %v839 = vpack.c.b16 %v775, %v775
    %v840 = vpack.c.b16 %v776, %v776
    %v841 = vpack.c.b16 %v777, %v777
    %v842 = vpack.c.b16 %v778, %v778
    %v843 = vpack.c.b16 %v779, %v779
    %v844 = vpack.c.b16 %v780, %v780
    %v845 = vpack.c.b16 %v781, %v781
    %v846 = vpack.c.b16 %v782, %v782
    %v847 = vpack.c.b16 %v783, %v783
    %v848 = vpack.c.b16 %v784, %v784
    %v849 = vpack.c.b16 %v785, %v785
    %v850 = vpack.c.b16 %v786, %v786
    %vm915 = vcmask 519168
    %916 = vst.msk [vmem:[%s2] sm:$0xf] %vm915, %v787
    %917 = vst.msk [vmem:[%s2 + $0x4] sm:$0xf] %vm915, %v788
    %918 = vst.msk [vmem:[%s2 + $0x8] sm:$0xf] %vm915, %v789
    %919 = vst.msk [vmem:[%s2 + $0xc] sm:$0xf] %vm915, %v790
    %920 = vst.msk [vmem:[%s2 + $0x10] sm:$0xf] %vm915, %v791
    %921 = vst.msk [vmem:[%s2 + $0x14] sm:$0xf] %vm915, %v792
    %922 = vst.msk [vmem:[%s2 + $0x18] sm:$0xf] %vm915, %v793
    %923 = vst.msk [vmem:[%s2 + $0x1c] sm:$0xf] %vm915, %v794
    %924 = vst.msk [vmem:[%s2 + $0x20] sm:$0xf] %vm915, %v795
    %925 = vst.msk [vmem:[%s2 + $0x24] sm:$0xf] %vm915, %v796
    %926 = vst.msk [vmem:[%s2 + $0x28] sm:$0xf] %vm915, %v797
    %927 = vst.msk [vmem:[%s2 + $0x2c] sm:$0xf] %vm915, %v798
    %928 = vst.msk [vmem:[%s2 + $0x30] sm:$0xf] %vm915, %v799
    %929 = vst.msk [vmem:[%s2 + $0x34] sm:$0xf] %vm915, %v800
    %930 = vst.msk [vmem:[%s2 + $0x38] sm:$0xf] %vm915, %v801
    %931 = vst.msk [vmem:[%s2 + $0x3c] sm:$0xf] %vm915, %v802
    %932 = vst.msk [vmem:[%s2 + $0x40] sm:$0xf] %vm915, %v803
    %933 = vst.msk [vmem:[%s2 + $0x44] sm:$0xf] %vm915, %v804
    %934 = vst.msk [vmem:[%s2 + $0x48] sm:$0xf] %vm915, %v805
    %935 = vst.msk [vmem:[%s2 + $0x4c] sm:$0xf] %vm915, %v806
    %936 = vst.msk [vmem:[%s2 + $0x50] sm:$0xf] %vm915, %v807
    %937 = vst.msk [vmem:[%s2 + $0x54] sm:$0xf] %vm915, %v808
    %938 = vst.msk [vmem:[%s2 + $0x58] sm:$0xf] %vm915, %v809
    %939 = vst.msk [vmem:[%s2 + $0x5c] sm:$0xf] %vm915, %v810
    %940 = vst.msk [vmem:[%s2 + $0x60] sm:$0xf] %vm915, %v811
    %941 = vst.msk [vmem:[%s2 + $0x64] sm:$0xf] %vm915, %v812
    %942 = vst.msk [vmem:[%s2 + $0x68] sm:$0xf] %vm915, %v813
    %943 = vst.msk [vmem:[%s2 + $0x6c] sm:$0xf] %vm915, %v814
    %944 = vst.msk [vmem:[%s2 + $0x70] sm:$0xf] %vm915, %v815
    %945 = vst.msk [vmem:[%s2 + $0x74] sm:$0xf] %vm915, %v816
    %946 = vst.msk [vmem:[%s2 + $0x78] sm:$0xf] %vm915, %v817
    %947 = vst.msk [vmem:[%s2 + $0x7c] sm:$0xf] %vm915, %v818
    %948 = vst.msk [vmem:[%s2 + $0x80] sm:$0xf] %vm915, %v819
    %949 = vst.msk [vmem:[%s2 + $0x84] sm:$0xf] %vm915, %v820
    %950 = vst.msk [vmem:[%s2 + $0x88] sm:$0xf] %vm915, %v821
    %951 = vst.msk [vmem:[%s2 + $0x8c] sm:$0xf] %vm915, %v822
    %952 = vst.msk [vmem:[%s2 + $0x90] sm:$0xf] %vm915, %v823
    %953 = vst.msk [vmem:[%s2 + $0x94] sm:$0xf] %vm915, %v824
    %954 = vst.msk [vmem:[%s2 + $0x98] sm:$0xf] %vm915, %v825
    %955 = vst.msk [vmem:[%s2 + $0x9c] sm:$0xf] %vm915, %v826
    %956 = vst.msk [vmem:[%s2 + $0xa0] sm:$0xf] %vm915, %v827
    %957 = vst.msk [vmem:[%s2 + $0xa4] sm:$0xf] %vm915, %v828
    %958 = vst.msk [vmem:[%s2 + $0xa8] sm:$0xf] %vm915, %v829
    %959 = vst.msk [vmem:[%s2 + $0xac] sm:$0xf] %vm915, %v830
    %960 = vst.msk [vmem:[%s2 + $0xb0] sm:$0xf] %vm915, %v831
    %961 = vst.msk [vmem:[%s2 + $0xb4] sm:$0xf] %vm915, %v832
    %962 = vst.msk [vmem:[%s2 + $0xb8] sm:$0xf] %vm915, %v833
    %963 = vst.msk [vmem:[%s2 + $0xbc] sm:$0xf] %vm915, %v834
    %964 = vst.msk [vmem:[%s2 + $0xc0] sm:$0xf] %vm915, %v835
    %965 = vst.msk [vmem:[%s2 + $0xc4] sm:$0xf] %vm915, %v836
    %966 = vst.msk [vmem:[%s2 + $0xc8] sm:$0xf] %vm915, %v837
    %967 = vst.msk [vmem:[%s2 + $0xcc] sm:$0xf] %vm915, %v838
    %968 = vst.msk [vmem:[%s2 + $0xd0] sm:$0xf] %vm915, %v839
    %969 = vst.msk [vmem:[%s2 + $0xd4] sm:$0xf] %vm915, %v840
    %970 = vst.msk [vmem:[%s2 + $0xd8] sm:$0xf] %vm915, %v841
    %971 = vst.msk [vmem:[%s2 + $0xdc] sm:$0xf] %vm915, %v842
    %972 = vst.msk [vmem:[%s2 + $0xe0] sm:$0xf] %vm915, %v843
    %973 = vst.msk [vmem:[%s2 + $0xe4] sm:$0xf] %vm915, %v844
    %974 = vst.msk [vmem:[%s2 + $0xe8] sm:$0xf] %vm915, %v845
    %975 = vst.msk [vmem:[%s2 + $0xec] sm:$0xf] %vm915, %v846
    %976 = vst.msk [vmem:[%s2 + $0xf0] sm:$0xf] %vm915, %v847
    %977 = vst.msk [vmem:[%s2 + $0xf4] sm:$0xf] %vm915, %v848
    %978 = vst.msk [vmem:[%s2 + $0xf8] sm:$0xf] %vm915, %v849
    %979 = vst.msk [vmem:[%s2 + $0xfc] sm:$0xf] %vm915, %v850
    %vm980 = vcmask 523264
    %v981 = vsel %vm980, %v405, 0.0
    %v982 = vsel %vm980, %v408, 0.0
    %v983 = vadd.f32 %v981, %v982
    %v984 = vsel %vm980, %v413, 0.0
    %v985 = vadd.f32 %v983, %v984
    %v986 = vsel %vm980, %v416, 0.0
    %v987 = vadd.f32 %v985, %v986
    %v988 = vsel %vm980, %v421, 0.0
    %v989 = vadd.f32 %v987, %v988
    %v990 = vsel %vm980, %v424, 0.0
    %v991 = vadd.f32 %v989, %v990
    %v992 = vsel %vm980, %v429, 0.0
    %v993 = vadd.f32 %v991, %v992
    %v994 = vsel %vm980, %v432, 0.0
    %v995 = vadd.f32 %v993, %v994
    %v996 = vsel %vm980, %v437, 0.0
    %v997 = vadd.f32 %v995, %v996
    %v998 = vsel %vm980, %v440, 0.0
    %v999 = vadd.f32 %v997, %v998
    %v1000 = vsel %vm980, %v445, 0.0
    %v1001 = vadd.f32 %v999, %v1000
    %v1002 = vsel %vm980, %v448, 0.0
    %v1003 = vadd.f32 %v1001, %v1002
    %v1004 = vsel %vm980, %v453, 0.0
    %v1005 = vadd.f32 %v1003, %v1004
    %v1006 = vsel %vm980, %v456, 0.0
    %v1007 = vadd.f32 %v1005, %v1006
    %v1008 = vsel %vm980, %v461, 0.0
    %v1009 = vadd.f32 %v1007, %v1008
    %v1010 = vsel %vm980, %v464, 0.0
    %v1011 = vadd.f32 %v1009, %v1010
    %v1012 = vsel %vm980, %v469, 0.0
    %v1013 = vadd.f32 %v1011, %v1012
    %v1014 = vsel %vm980, %v472, 0.0
    %v1015 = vadd.f32 %v1013, %v1014
    %v1016 = vsel %vm980, %v477, 0.0
    %v1017 = vadd.f32 %v1015, %v1016
    %v1018 = vsel %vm980, %v480, 0.0
    %v1019 = vadd.f32 %v1017, %v1018
    %v1020 = vsel %vm980, %v485, 0.0
    %v1021 = vadd.f32 %v1019, %v1020
    %v1022 = vsel %vm980, %v488, 0.0
    %v1023 = vadd.f32 %v1021, %v1022
    %v1024 = vsel %vm980, %v493, 0.0
    %v1025 = vadd.f32 %v1023, %v1024
    %v1026 = vsel %vm980, %v496, 0.0
    %v1027 = vadd.f32 %v1025, %v1026
    %v1028 = vsel %vm980, %v501, 0.0
    %v1029 = vadd.f32 %v1027, %v1028
    %v1030 = vsel %vm980, %v504, 0.0
    %v1031 = vadd.f32 %v1029, %v1030
    %v1032 = vsel %vm980, %v509, 0.0
    %v1033 = vadd.f32 %v1031, %v1032
    %v1034 = vsel %vm980, %v512, 0.0
    %v1035 = vadd.f32 %v1033, %v1034
    %v1036 = vsel %vm980, %v517, 0.0
    %v1037 = vadd.f32 %v1035, %v1036
    %v1038 = vsel %vm980, %v520, 0.0
    %v1039 = vadd.f32 %v1037, %v1038
    %v1040 = vsel %vm980, %v525, 0.0
    %v1041 = vadd.f32 %v1039, %v1040
    %v1042 = vsel %vm980, %v528, 0.0
    %v1043 = vadd.f32 %v1041, %v1042
    %v1044 = vsel %vm980, %v533, 0.0
    %v1045 = vadd.f32 %v1043, %v1044
    %v1046 = vsel %vm980, %v536, 0.0
    %v1047 = vadd.f32 %v1045, %v1046
    %v1048 = vsel %vm980, %v541, 0.0
    %v1049 = vadd.f32 %v1047, %v1048
    %v1050 = vsel %vm980, %v544, 0.0
    %v1051 = vadd.f32 %v1049, %v1050
    %v1052 = vsel %vm980, %v549, 0.0
    %v1053 = vadd.f32 %v1051, %v1052
    %v1054 = vsel %vm980, %v552, 0.0
    %v1055 = vadd.f32 %v1053, %v1054
    %v1056 = vsel %vm980, %v557, 0.0
    %v1057 = vadd.f32 %v1055, %v1056
    %v1058 = vsel %vm980, %v560, 0.0
    %v1059 = vadd.f32 %v1057, %v1058
    %v1060 = vsel %vm980, %v565, 0.0
    %v1061 = vadd.f32 %v1059, %v1060
    %v1062 = vsel %vm980, %v568, 0.0
    %v1063 = vadd.f32 %v1061, %v1062
    %v1064 = vsel %vm980, %v573, 0.0
    %v1065 = vadd.f32 %v1063, %v1064
    %v1066 = vsel %vm980, %v576, 0.0
    %v1067 = vadd.f32 %v1065, %v1066
    %v1068 = vsel %vm980, %v581, 0.0
    %v1069 = vadd.f32 %v1067, %v1068
    %v1070 = vsel %vm980, %v584, 0.0
    %v1071 = vadd.f32 %v1069, %v1070
    %v1072 = vsel %vm980, %v589, 0.0
    %v1073 = vadd.f32 %v1071, %v1072
    %v1074 = vsel %vm980, %v592, 0.0
    %v1075 = vadd.f32 %v1073, %v1074
    %v1076 = vsel %vm980, %v597, 0.0
    %v1077 = vadd.f32 %v1075, %v1076
    %v1078 = vsel %vm980, %v600, 0.0
    %v1079 = vadd.f32 %v1077, %v1078
    %v1080 = vsel %vm980, %v605, 0.0
    %v1081 = vadd.f32 %v1079, %v1080
    %v1082 = vsel %vm980, %v608, 0.0
    %v1083 = vadd.f32 %v1081, %v1082
    %v1084 = vsel %vm980, %v613, 0.0
    %v1085 = vadd.f32 %v1083, %v1084
    %v1086 = vsel %vm980, %v616, 0.0
    %v1087 = vadd.f32 %v1085, %v1086
    %v1088 = vsel %vm980, %v621, 0.0
    %v1089 = vadd.f32 %v1087, %v1088
    %v1090 = vsel %vm980, %v624, 0.0
    %v1091 = vadd.f32 %v1089, %v1090
    %v1092 = vsel %vm980, %v629, 0.0
    %v1093 = vadd.f32 %v1091, %v1092
    %v1094 = vsel %vm980, %v632, 0.0
    %v1095 = vadd.f32 %v1093, %v1094
    %v1096 = vsel %vm980, %v637, 0.0
    %v1097 = vadd.f32 %v1095, %v1096
    %v1098 = vsel %vm980, %v640, 0.0
    %v1099 = vadd.f32 %v1097, %v1098
    %v1100 = vsel %vm980, %v645, 0.0
    %v1101 = vadd.f32 %v1099, %v1100
    %v1102 = vsel %vm980, %v648, 0.0
    %v1103 = vadd.f32 %v1101, %v1102
    %v1104 = vsel %vm980, %v653, 0.0
    %v1105 = vadd.f32 %v1103, %v1104
    %v1106 = vsel %vm980, %v656, 0.0
    %v1107 = vadd.f32 %v1105, %v1106
    %v1108 = vrot.slane %v1107, 4
    %v1109 = vadd.f32 %v1107, %v1108
    %v1110 = vrot.slane %v1109, 2
    %v1111 = vadd.f32 %v1109, %v1110
    %v1112 = vrot.slane %v1111, 1
    %v1113 = vadd.f32 %v1111, %v1112
    %v1114 = vmul.f32 %v405, %v405
    %v1115 = vmul.f32 %v408, %v408
    %v1116 = vmul.f32 %v413, %v413
    %v1117 = vmul.f32 %v416, %v416
    %v1118 = vmul.f32 %v421, %v421
    %v1119 = vmul.f32 %v424, %v424
    %v1120 = vmul.f32 %v429, %v429
    %v1121 = vmul.f32 %v432, %v432
    %v1122 = vmul.f32 %v437, %v437
    %v1123 = vmul.f32 %v440, %v440
    %v1124 = vmul.f32 %v445, %v445
    %v1125 = vmul.f32 %v448, %v448
    %v1126 = vmul.f32 %v453, %v453
    %v1127 = vmul.f32 %v456, %v456
    %v1128 = vmul.f32 %v461, %v461
    %v1129 = vmul.f32 %v464, %v464
    %v1130 = vmul.f32 %v469, %v469
    %v1131 = vmul.f32 %v472, %v472
    %v1132 = vmul.f32 %v477, %v477
    %v1133 = vmul.f32 %v480, %v480
    %v1134 = vmul.f32 %v485, %v485
    %v1135 = vmul.f32 %v488, %v488
    %v1136 = vmul.f32 %v493, %v493
    %v1137 = vmul.f32 %v496, %v496
    %v1138 = vmul.f32 %v501, %v501
    %v1139 = vmul.f32 %v504, %v504
    %v1140 = vmul.f32 %v509, %v509
    %v1141 = vmul.f32 %v512, %v512
    %v1142 = vmul.f32 %v517, %v517
    %v1143 = vmul.f32 %v520, %v520
    %v1144 = vmul.f32 %v525, %v525
    %v1145 = vmul.f32 %v528, %v528
    %v1146 = vmul.f32 %v533, %v533
    %v1147 = vmul.f32 %v536, %v536
    %v1148 = vmul.f32 %v541, %v541
    %v1149 = vmul.f32 %v544, %v544
    %v1150 = vmul.f32 %v549, %v549
    %v1151 = vmul.f32 %v552, %v552
    %v1152 = vmul.f32 %v557, %v557
    %v1153 = vmul.f32 %v560, %v560
    %v1154 = vmul.f32 %v565, %v565
    %v1155 = vmul.f32 %v568, %v568
    %v1156 = vmul.f32 %v573, %v573
    %v1157 = vmul.f32 %v576, %v576
    %v1158 = vmul.f32 %v581, %v581
    %v1159 = vmul.f32 %v584, %v584
    %v1160 = vmul.f32 %v589, %v589
    %v1161 = vmul.f32 %v592, %v592
    %v1162 = vmul.f32 %v597, %v597
    %v1163 = vmul.f32 %v600, %v600
    %v1164 = vmul.f32 %v605, %v605
    %v1165 = vmul.f32 %v608, %v608
    %v1166 = vmul.f32 %v613, %v613
    %v1167 = vmul.f32 %v616, %v616
    %v1168 = vmul.f32 %v621, %v621
    %v1169 = vmul.f32 %v624, %v624
    %v1170 = vmul.f32 %v629, %v629
    %v1171 = vmul.f32 %v632, %v632
    %v1172 = vmul.f32 %v637, %v637
    %v1173 = vmul.f32 %v640, %v640
    %v1174 = vmul.f32 %v645, %v645
    %v1175 = vmul.f32 %v648, %v648
    %v1176 = vmul.f32 %v653, %v653
    %v1177 = vmul.f32 %v656, %v656
    %v1178 = vsel %vm980, %v1114, 0.0
    %v1179 = vsel %vm980, %v1115, 0.0
    %v1180 = vadd.f32 %v1178, %v1179
    %v1181 = vsel %vm980, %v1116, 0.0
    %v1182 = vadd.f32 %v1180, %v1181
    %v1183 = vsel %vm980, %v1117, 0.0
    %v1184 = vadd.f32 %v1182, %v1183
    %v1185 = vsel %vm980, %v1118, 0.0
    %v1186 = vadd.f32 %v1184, %v1185
    %v1187 = vsel %vm980, %v1119, 0.0
    %v1188 = vadd.f32 %v1186, %v1187
    %v1189 = vsel %vm980, %v1120, 0.0
    %v1190 = vadd.f32 %v1188, %v1189
    %v1191 = vsel %vm980, %v1121, 0.0
    %v1192 = vadd.f32 %v1190, %v1191
    %v1193 = vsel %vm980, %v1122, 0.0
    %v1194 = vadd.f32 %v1192, %v1193
    %v1195 = vsel %vm980, %v1123, 0.0
    %v1196 = vadd.f32 %v1194, %v1195
    %v1197 = vsel %vm980, %v1124, 0.0
    %v1198 = vadd.f32 %v1196, %v1197
    %v1199 = vsel %vm980, %v1125, 0.0
    %v1200 = vadd.f32 %v1198, %v1199
    %v1201 = vsel %vm980, %v1126, 0.0
    %v1202 = vadd.f32 %v1200, %v1201
    %v1203 = vsel %vm980, %v1127, 0.0
    %v1204 = vadd.f32 %v1202, %v1203
    %v1205 = vsel %vm980, %v1128, 0.0
    %v1206 = vadd.f32 %v1204, %v1205
    %v1207 = vsel %vm980, %v1129, 0.0
    %v1208 = vadd.f32 %v1206, %v1207
    %v1209 = vsel %vm980, %v1130, 0.0
    %v1210 = vadd.f32 %v1208, %v1209
    %v1211 = vsel %vm980, %v1131, 0.0
    %v1212 = vadd.f32 %v1210, %v1211
    %v1213 = vsel %vm980, %v1132, 0.0
    %v1214 = vadd.f32 %v1212, %v1213
    %v1215 = vsel %vm980, %v1133, 0.0
    %v1216 = vadd.f32 %v1214, %v1215
    %v1217 = vsel %vm980, %v1134, 0.0
    %v1218 = vadd.f32 %v1216, %v1217
    %v1219 = vsel %vm980, %v1135, 0.0
    %v1220 = vadd.f32 %v1218, %v1219
    %v1221 = vsel %vm980, %v1136, 0.0
    %v1222 = vadd.f32 %v1220, %v1221
    %v1223 = vsel %vm980, %v1137, 0.0
    %v1224 = vadd.f32 %v1222, %v1223
    %v1225 = vsel %vm980, %v1138, 0.0
    %v1226 = vadd.f32 %v1224, %v1225
    %v1227 = vsel %vm980, %v1139, 0.0
    %v1228 = vadd.f32 %v1226, %v1227
    %v1229 = vsel %vm980, %v1140, 0.0
    %v1230 = vadd.f32 %v1228, %v1229
    %v1231 = vsel %vm980, %v1141, 0.0
    %v1232 = vadd.f32 %v1230, %v1231
    %v1233 = vsel %vm980, %v1142, 0.0
    %v1234 = vadd.f32 %v1232, %v1233
    %v1235 = vsel %vm980, %v1143, 0.0
    %v1236 = vadd.f32 %v1234, %v1235
    %v1237 = vsel %vm980, %v1144, 0.0
    %v1238 = vadd.f32 %v1236, %v1237
    %v1239 = vsel %vm980, %v1145, 0.0
    %v1240 = vadd.f32 %v1238, %v1239
    %v1241 = vsel %vm980, %v1146, 0.0
    %v1242 = vadd.f32 %v1240, %v1241
    %v1243 = vsel %vm980, %v1147, 0.0
    %v1244 = vadd.f32 %v1242, %v1243
    %v1245 = vsel %vm980, %v1148, 0.0
    %v1246 = vadd.f32 %v1244, %v1245
    %v1247 = vsel %vm980, %v1149, 0.0
    %v1248 = vadd.f32 %v1246, %v1247
    %v1249 = vsel %vm980, %v1150, 0.0
    %v1250 = vadd.f32 %v1248, %v1249
    %v1251 = vsel %vm980, %v1151, 0.0
    %v1252 = vadd.f32 %v1250, %v1251
    %v1253 = vsel %vm980, %v1152, 0.0
    %v1254 = vadd.f32 %v1252, %v1253
    %v1255 = vsel %vm980, %v1153, 0.0
    %v1256 = vadd.f32 %v1254, %v1255
    %v1257 = vsel %vm980, %v1154, 0.0
    %v1258 = vadd.f32 %v1256, %v1257
    %v1259 = vsel %vm980, %v1155, 0.0
    %v1260 = vadd.f32 %v1258, %v1259
    %v1261 = vsel %vm980, %v1156, 0.0
    %v1262 = vadd.f32 %v1260, %v1261
    %v1263 = vsel %vm980, %v1157, 0.0
    %v1264 = vadd.f32 %v1262, %v1263
    %v1265 = vsel %vm980, %v1158, 0.0
    %v1266 = vadd.f32 %v1264, %v1265
    %v1267 = vsel %vm980, %v1159, 0.0
    %v1268 = vadd.f32 %v1266, %v1267
    %v1269 = vsel %vm980, %v1160, 0.0
    %v1270 = vadd.f32 %v1268, %v1269
    %v1271 = vsel %vm980, %v1161, 0.0
    %v1272 = vadd.f32 %v1270, %v1271
    %v1273 = vsel %vm980, %v1162, 0.0
    %v1274 = vadd.f32 %v1272, %v1273
    %v1275 = vsel %vm980, %v1163, 0.0
    %v1276 = vadd.f32 %v1274, %v1275
    %v1277 = vsel %vm980, %v1164, 0.0
    %v1278 = vadd.f32 %v1276, %v1277
    %v1279 = vsel %vm980, %v1165, 0.0
    %v1280 = vadd.f32 %v1278, %v1279
    %v1281 = vsel %vm980, %v1166, 0.0
    %v1282 = vadd.f32 %v1280, %v1281
    %v1283 = vsel %vm980, %v1167, 0.0
    %v1284 = vadd.f32 %v1282, %v1283
    %v1285 = vsel %vm980, %v1168, 0.0
    %v1286 = vadd.f32 %v1284, %v1285
    %v1287 = vsel %vm980, %v1169, 0.0
    %v1288 = vadd.f32 %v1286, %v1287
    %v1289 = vsel %vm980, %v1170, 0.0
    %v1290 = vadd.f32 %v1288, %v1289
    %v1291 = vsel %vm980, %v1171, 0.0
    %v1292 = vadd.f32 %v1290, %v1291
    %v1293 = vsel %vm980, %v1172, 0.0
    %v1294 = vadd.f32 %v1292, %v1293
    %v1295 = vsel %vm980, %v1173, 0.0
    %v1296 = vadd.f32 %v1294, %v1295
    %v1297 = vsel %vm980, %v1174, 0.0
    %v1298 = vadd.f32 %v1296, %v1297
    %v1299 = vsel %vm980, %v1175, 0.0
    %v1300 = vadd.f32 %v1298, %v1299
    %v1301 = vsel %vm980, %v1176, 0.0
    %v1302 = vadd.f32 %v1300, %v1301
    %v1303 = vsel %vm980, %v1177, 0.0
    %v1304 = vadd.f32 %v1302, %v1303
    %v1305 = vrot.slane %v1304, 4
    %v1306 = vadd.f32 %v1304, %v1305
    %v1307 = vrot.slane %v1306, 2
    %v1308 = vadd.f32 %v1306, %v1307
    %v1309 = vrot.slane %v1308, 1
    %v1310 = vadd.f32 %v1308, %v1309
    %v1311 = vsel %vm364, %v1113, %v1310
    %vm1312 = vcmask 517120
    %1313 = vst.msk [vmem:[#allocation2] sm:$0x3] %vm1312, %v1311
    // Predicated region
    $region10: #{matmul_stats_pallas.1} parent=1 // pred_check
      _
    $region11: #{matmul_stats_pallas.1} parent=1 // pred_check_branch
      %1315 = sbr.rel (0) target = $region13
    $region12: #{matmul_stats_pallas.1} parent=1 // pred_region
      _
    $region13: #{matmul_stats_pallas.1} parent=1 // pred_fallthru
      _
    // Predicated region
    $region14: #{matmul_stats_pallas.1} parent=1 // pred_check
      _
    $region15: #{matmul_stats_pallas.1} parent=1 // pred_check_branch
      %1317 = sbr.rel (0) target = $region17
    $region16: #{matmul_stats_pallas.1} parent=1 // pred_region
      %s1319 = ssub.s32 32, 32
      %1320 = vsyncadd [#allocation3], %s1319
      %s1322 = sshll.u32 [#allocation2], 4
      %s1323 = int_to_ptr.vmem [resolvable:$true] %s1322
      %1325 = dma.vmem_to_hbm [thread:$0]  %s1323, 32, %s3, [#allocation3]
    $region17: #{matmul_stats_pallas.1} parent=1 // pred_fallthru
      _
    // Predicated region
    $region18: #{matmul_stats_pallas.1} parent=1 // pred_check
      _
    $region19: #{matmul_stats_pallas.1} parent=1 // pred_check_branch
      %1327 = sbr.rel (0) target = $region21
    $region20: #{matmul_stats_pallas.1} parent=1 // pred_region
      _
    $region21: #{matmul_stats_pallas.1} parent=1 // pred_fallthru
      _
    // Predicated region
    $region22: #{matmul_stats_pallas.1} parent=1 // pred_check
      _
    $region23: #{matmul_stats_pallas.1} parent=1 // pred_check_branch
      %1329 = sbr.rel (0) target = $region25
    $region24: #{matmul_stats_pallas.1} parent=1 // pred_region
      %1330 = dma.done [#allocation3], 32
    $region25: #{matmul_stats_pallas.1} parent=1 // pred_fallthru
      _
    %1331 = vsyncpa [#allocation3], 1

</llo_original>
